<compile_context>
chip_gen: v7x
topology: tpu7x:2x2x1
jax: 0.10.0
libtpu: 0.0.40
codegen_flags: <defaults>
</compile_context>

<pallas_src>
import functools

import jax
import jax.numpy as jnp
from jax.experimental import pallas as pl
from jax.experimental.pallas import tpu as pltpu

LANE = 128
_MIB = 1 << 20


def mlp_kernel(x_ref,
               w1_ref, b1_ref,
               w2_ref, b2_ref,
               w3_ref, b3_ref,
               w4_ref, b4_ref,
               o_ref):
    # Whole hot path (4 matmuls + biases + 3 ReLUs) fused in one kernel body.
    x = x_ref[...]

    h = jnp.dot(x, w1_ref[...], preferred_element_type=jnp.float32) + b1_ref[...]
    h = jnp.maximum(h, 0.0)
    h = h.astype(w2_ref.dtype)

    h = jnp.dot(h, w2_ref[...], preferred_element_type=jnp.float32) + b2_ref[...]
    h = jnp.maximum(h, 0.0)
    h = h.astype(w3_ref.dtype)

    h = jnp.dot(h, w3_ref[...], preferred_element_type=jnp.float32) + b3_ref[...]
    h = jnp.maximum(h, 0.0)
    h = h.astype(w4_ref.dtype)

    # Final layer: narrow (tile, n_output) result stored directly (no padded
    # writeback, no wrapper-side slice).
    y = jnp.dot(h, w4_ref[...], preferred_element_type=jnp.float32) + b4_ref[...]
    o_ref[...] = y.astype(o_ref.dtype)


def _round_up(n, m):
    return ((n + m - 1) // m) * m


def pad_params(params, lane=LANE, compute_dtype=jnp.float32):
    """Zero-pad the HIDDEN feature dim up to a lane multiple (done once).

    Padding is exact: padded hidden units are ReLU(0) = 0 and padded weight
    rows/cols are 0.  The output dim of w4/b4 is left narrow; the kernel writes
    it directly.  Weight matrices may be cast to `compute_dtype` (e.g. bf16);
    biases stay f32 so they add onto the f32 MXU accumulator.
    """
    w1, b1, w2, b2, w3, b3, w4, b4 = params
    n_input = w1.shape[0]
    n_hidden = w1.shape[1]
    n_output = w4.shape[1]
    hp = _round_up(n_hidden, lane)

    def pad(a, shape):
        return jnp.pad(a, [(0, s - d) for d, s in zip(a.shape, shape)])

    cast = lambda a: a.astype(compute_dtype)
    f32 = lambda a: a.astype(jnp.float32)
    return (cast(pad(w1, (n_input, hp))), f32(pad(b1, (1, hp))),
            cast(pad(w2, (hp, hp))),      f32(pad(b2, (1, hp))),
            cast(pad(w3, (hp, hp))),      f32(pad(b3, (1, hp))),
            cast(pad(w4, (hp, n_output))), f32(pad(b4, (1, n_output))))


def _num_tensorcores():
    """2 on v7x (megacore-style grid sharding), 1 on v5e/v6e; default 1."""
    try:
        kind = jax.devices()[0].device_kind.lower()
        if "v7" in kind:
            return 2
    except Exception:  # pragma: no cover - defensive
        pass
    return 1


def _pick_batch_tile(B, num_cores):
    candidates = [t for t in (4096, 2048, 1024, 512, 256, 128, 64, 32, 16, 8)
                  if t <= B]
    if num_cores <= 1:
        # Single TC: the grid is a serial loop; splitting only adds per-step
        # overhead.  Take the largest dividing tile (ideally the whole batch).
        for t in candidates:
            if B % t == 0:
                return t
        return B
    # 2 TCs (v7x): prefer an EVEN number of grid steps (balanced work), >= 2.
    fallback = None
    for t in candidates:
        if B % t == 0:
            steps = B // t
            if steps >= 2 and steps % 2 == 0:
                return t
            if fallback is None and steps >= 2:
                fallback = t
    return fallback if fallback is not None else B


def _vmem_estimate_bytes(batch_tile, n_input, hp, n_output, params):
    itemsize = jnp.dtype(params[0].dtype).itemsize
    x_bytes = 2 * batch_tile * max(n_input, LANE) * itemsize        # double-buffered
    out_bytes = 2 * batch_tile * LANE * 4                           # (lane-rounded)
    w_bytes = 2 * sum(int(p.size) * jnp.dtype(p.dtype).itemsize for p in params)
    inter_bytes = 2 * batch_tile * hp * 4                           # live layer intermediates
    return x_bytes + out_bytes + w_bytes + inter_bytes


def mlp_forward(x, padded_params, *, batch_tile=None):
    """padded_params = pad_params((w1, b1, ..., w4, b4)); biases shaped (1, n)."""
    (w1, b1, w2, b2, w3, b3, w4, b4) = padded_params
    B, n_input = x.shape
    hp = w1.shape[1]
    n_output = w4.shape[1]

    if batch_tile is None:
        batch_tile = _pick_batch_tile(B, _num_tensorcores())
    assert B % batch_tile == 0, "batch must be divisible by batch_tile"

    # Match x dtype to the weight compute dtype (bf16 path) without touching
    # the caller's array when it already matches.
    if x.dtype != w1.dtype:
        x = x.astype(w1.dtype)

    # Weights/biases are small and grid-invariant: constant index_map means the
    # pipeline only DMAs them once (no re-fetch on revisit).
    def full_spec(a):
        return pl.BlockSpec(a.shape, lambda i: (0, 0))

    grid = (B // batch_tile,)

    # Only raise the scoped-VMEM limit when the estimated footprint needs it.
    est = _vmem_estimate_bytes(batch_tile, n_input, hp, n_output, padded_params)
    vmem_limit = None
    if est > 24 * _MIB:
        vmem_limit = min(int(est * 2), 48 * _MIB)

    compiler_params = pltpu.CompilerParams(
        dimension_semantics=("parallel",),
        vmem_limit_bytes=vmem_limit)

    out = pl.pallas_call(
        mlp_kernel,
        out_shape=jax.ShapeDtypeStruct((B, n_output), jnp.float32),
        grid_spec=pltpu.PrefetchScalarGridSpec(
            num_scalar_prefetch=0,
            grid=grid,
            in_specs=[
                pl.BlockSpec((batch_tile, n_input), lambda i: (i, 0)),   # x tile
                full_spec(w1), full_spec(b1),
                full_spec(w2), full_spec(b2),
                full_spec(w3), full_spec(b3),
                full_spec(w4), full_spec(b4),
            ],
            # Narrow output block: last dim equals the full array dim -> legal,
            # and avoids any padded HBM writeback / wrapper-side slice.
            out_specs=pl.BlockSpec((batch_tile, n_output), lambda i: (i, 0)),
        ),
        compiler_params=compiler_params,
    )(x, w1, b1, w2, b2, w3, b3, w4, b4)

    return out


def init_params(key, n_input, n_hidden, n_output, dtype=jnp.float32):
    """Deterministic synthetic init (Kaiming-uniform-ish like torch default)."""
    dims = [(n_input, n_hidden), (n_hidden, n_hidden),
            (n_hidden, n_hidden), (n_hidden, n_output)]
    params = []
    for (fan_in, fan_out) in dims:
        key, kw, kb = jax.random.split(key, 3)
        bound = 1.0 / jnp.sqrt(fan_in)
        w = jax.random.uniform(kw, (fan_in, fan_out), dtype, -bound, bound)
        b = jax.random.uniform(kb, (1, fan_out), dtype, -bound, bound)
        params.extend([w, b])
    return tuple(params)


def mlp_forward_ref(x, params):
    (w1, b1, w2, b2, w3, b3, w4, b4) = params
    h = jnp.maximum(x @ w1 + b1, 0.0)
    h = jnp.maximum(h @ w2 + b2, 0.0)
    h = jnp.maximum(h @ w3 + b3, 0.0)
    return h @ w4 + b4


if __name__ == "__main__":
    key = jax.random.PRNGKey(0)
    n_input, n_hidden, n_output = 16, 32, 8
    batch = 256  # single-TC chips -> 1 grid step; v7x -> 2 balanced steps

    kx, kp = jax.random.split(key)
    x = jax.random.normal(kx, (batch, n_input), jnp.float32)
    params = init_params(kp, n_input, n_hidden, n_output)

    # Done once, outside the hot path.  Set compute_dtype=jnp.bfloat16 to halve
    # weight/activation DMA bytes (loosen the tolerance below if you do).
    padded_params = pad_params(params, compute_dtype=jnp.float32)

    fwd = jax.jit(functools.partial(mlp_forward, padded_params=padded_params))
    y = jax.block_until_ready(fwd(x))

    y_ref = mlp_forward_ref(x, params)
    assert y.shape == (batch, n_output)
    assert jnp.allclose(y, y_ref, atol=1e-5, rtol=1e-5), "mismatch vs reference"

    # TODO(synk): loss_on_batch (nn.MSELoss) is not part of forward(); if needed,
    # fuse a per-tile squared-error accumulator into this kernel via scratch +
    # pl.when on the last grid step.
    print("KERNEL_OK")
</pallas_src>

<mosaic_0001>
module attributes {stable_mosaic.version = 11 : i64} {
  func.func @mlp_kernel(%arg0: i32, %arg1: memref<256x16xf32, #tpu.memory_space<vmem>>, %arg2: memref<16x128xf32, #tpu.memory_space<vmem>>, %arg3: memref<1x128xf32, #tpu.memory_space<vmem>>, %arg4: memref<128x128xf32, #tpu.memory_space<vmem>>, %arg5: memref<1x128xf32, #tpu.memory_space<vmem>>, %arg6: memref<128x128xf32, #tpu.memory_space<vmem>>, %arg7: memref<1x128xf32, #tpu.memory_space<vmem>>, %arg8: memref<128x8xf32, #tpu.memory_space<vmem>>, %arg9: memref<1x8xf32, #tpu.memory_space<vmem>>, %arg10: memref<256x8xf32, #tpu.memory_space<vmem>>) attributes {dimension_semantics = [#tpu.dimension_semantics<parallel>], iteration_bounds = array<i64: 1>, scalar_prefetch = 0 : i64, scratch_operands = 0 : i64, tpu.core_type = #tpu.core_type<tc>, window_params = [{transform_indices = @transform_0, window_bounds = array<i64: 256, 16>}, {pipeline_mode = #tpu.pipeline_mode<synchronous>, transform_indices = @transform_1, window_bounds = array<i64: 16, 128>}, {pipeline_mode = #tpu.pipeline_mode<synchronous>, transform_indices = @transform_2, window_bounds = array<i64: 1, 128>}, {pipeline_mode = #tpu.pipeline_mode<synchronous>, transform_indices = @transform_3, window_bounds = array<i64: 128, 128>}, {pipeline_mode = #tpu.pipeline_mode<synchronous>, transform_indices = @transform_4, window_bounds = array<i64: 1, 128>}, {pipeline_mode = #tpu.pipeline_mode<synchronous>, transform_indices = @transform_5, window_bounds = array<i64: 128, 128>}, {pipeline_mode = #tpu.pipeline_mode<synchronous>, transform_indices = @transform_6, window_bounds = array<i64: 1, 128>}, {pipeline_mode = #tpu.pipeline_mode<synchronous>, transform_indices = @transform_7, window_bounds = array<i64: 128, 8>}, {pipeline_mode = #tpu.pipeline_mode<synchronous>, transform_indices = @transform_8, window_bounds = array<i64: 1, 8>}, {transform_indices = @transform_9, window_bounds = array<i64: 256, 8>}]} {
    %c0 = arith.constant 0 : index
    %c0_0 = arith.constant 0 : index
    %0 = vector.load %arg1[%c0, %c0_0] : memref<256x16xf32, #tpu.memory_space<vmem>>, vector<256x16xf32>
    %c0_1 = arith.constant 0 : index
    %c0_2 = arith.constant 0 : index
    %1 = vector.load %arg2[%c0_1, %c0_2] : memref<16x128xf32, #tpu.memory_space<vmem>>, vector<16x128xf32>
    %cst = arith.constant dense<0.000000e+00> : vector<256x128xf32>
    %2 = tpu.matmul %0, %1, %cst {dimension_numbers = #tpu.dot_dimension_numbers<[1], [0], [0], [1], [0, 0, 1, 1], [], []>} : vector<256x16xf32>, vector<16x128xf32>, vector<256x128xf32> -> vector<256x128xf32>
    %c0_3 = arith.constant 0 : index
    %c0_4 = arith.constant 0 : index
    %3 = vector.load %arg3[%c0_3, %c0_4] : memref<1x128xf32, #tpu.memory_space<vmem>>, vector<1x128xf32>
    %4 = vector.broadcast %3 : vector<1x128xf32> to vector<256x128xf32>
    %5 = arith.addf %2, %4 : vector<256x128xf32>
    %cst_5 = arith.constant 0.000000e+00 : f32
    %6 = vector.broadcast %cst_5 : f32 to vector<256x128xf32>
    %7 = arith.maximumf %5, %6 : vector<256x128xf32>
    %c0_6 = arith.constant 0 : index
    %c0_7 = arith.constant 0 : index
    %8 = vector.load %arg4[%c0_6, %c0_7] : memref<128x128xf32, #tpu.memory_space<vmem>>, vector<128x128xf32>
    %cst_8 = arith.constant dense<0.000000e+00> : vector<256x128xf32>
    %9 = tpu.matmul %7, %8, %cst_8 {dimension_numbers = #tpu.dot_dimension_numbers<[1], [0], [0], [1], [0, 0, 1, 1], [], []>} : vector<256x128xf32>, vector<128x128xf32>, vector<256x128xf32> -> vector<256x128xf32>
    %c0_9 = arith.constant 0 : index
    %c0_10 = arith.constant 0 : index
    %10 = vector.load %arg5[%c0_9, %c0_10] : memref<1x128xf32, #tpu.memory_space<vmem>>, vector<1x128xf32>
    %11 = vector.broadcast %10 : vector<1x128xf32> to vector<256x128xf32>
    %12 = arith.addf %9, %11 : vector<256x128xf32>
    %cst_11 = arith.constant 0.000000e+00 : f32
    %13 = vector.broadcast %cst_11 : f32 to vector<256x128xf32>
    %14 = arith.maximumf %12, %13 : vector<256x128xf32>
    %c0_12 = arith.constant 0 : index
    %c0_13 = arith.constant 0 : index
    %15 = vector.load %arg6[%c0_12, %c0_13] : memref<128x128xf32, #tpu.memory_space<vmem>>, vector<128x128xf32>
    %cst_14 = arith.constant dense<0.000000e+00> : vector<256x128xf32>
    %16 = tpu.matmul %14, %15, %cst_14 {dimension_numbers = #tpu.dot_dimension_numbers<[1], [0], [0], [1], [0, 0, 1, 1], [], []>} : vector<256x128xf32>, vector<128x128xf32>, vector<256x128xf32> -> vector<256x128xf32>
    %c0_15 = arith.constant 0 : index
    %c0_16 = arith.constant 0 : index
    %17 = vector.load %arg7[%c0_15, %c0_16] : memref<1x128xf32, #tpu.memory_space<vmem>>, vector<1x128xf32>
    %18 = vector.broadcast %17 : vector<1x128xf32> to vector<256x128xf32>
    %19 = arith.addf %16, %18 : vector<256x128xf32>
    %cst_17 = arith.constant 0.000000e+00 : f32
    %20 = vector.broadcast %cst_17 : f32 to vector<256x128xf32>
    %21 = arith.maximumf %19, %20 : vector<256x128xf32>
    %c0_18 = arith.constant 0 : index
    %c0_19 = arith.constant 0 : index
    %22 = vector.load %arg8[%c0_18, %c0_19] : memref<128x8xf32, #tpu.memory_space<vmem>>, vector<128x8xf32>
    %cst_20 = arith.constant dense<0.000000e+00> : vector<256x8xf32>
    %23 = tpu.matmul %21, %22, %cst_20 {dimension_numbers = #tpu.dot_dimension_numbers<[1], [0], [0], [1], [0, 0, 1, 1], [], []>} : vector<256x128xf32>, vector<128x8xf32>, vector<256x8xf32> -> vector<256x8xf32>
    %c0_21 = arith.constant 0 : index
    %c0_22 = arith.constant 0 : index
    %24 = vector.load %arg9[%c0_21, %c0_22] : memref<1x8xf32, #tpu.memory_space<vmem>>, vector<1x8xf32>
    %25 = vector.broadcast %24 : vector<1x8xf32> to vector<256x8xf32>
    %26 = arith.addf %23, %25 : vector<256x8xf32>
    %c0_23 = arith.constant 0 : index
    %c0_24 = arith.constant 0 : index
    %27 = vector.load %arg10[%c0_23, %c0_24] : memref<256x8xf32, #tpu.memory_space<vmem>>, vector<256x8xf32>
    tpu.vector_store %arg10[%c0_23, %c0_24], %26 {strides = array<i32>} : memref<256x8xf32, #tpu.memory_space<vmem>>, vector<256x8xf32>,
    return
  }
  func.func @transform_0(%arg0: i32) -> (i32, i32) {
    %c0_i32 = arith.constant 0 : i32
    %c0_i32_0 = arith.constant 0 : i32
    return %arg0, %c0_i32 : i32, i32
  }
  func.func @transform_1(%arg0: i32) -> (i32, i32) {
    %c0_i32 = arith.constant 0 : i32
    %c0_i32_0 = arith.constant 0 : i32
    %c0_i32_1 = arith.constant 0 : i32
    return %c0_i32, %c0_i32_0 : i32, i32
  }
  func.func @transform_2(%arg0: i32) -> (i32, i32) {
    %c0_i32 = arith.constant 0 : i32
    %c0_i32_0 = arith.constant 0 : i32
    %c0_i32_1 = arith.constant 0 : i32
    return %c0_i32, %c0_i32_0 : i32, i32
  }
  func.func @transform_3(%arg0: i32) -> (i32, i32) {
    %c0_i32 = arith.constant 0 : i32
    %c0_i32_0 = arith.constant 0 : i32
    %c0_i32_1 = arith.constant 0 : i32
    return %c0_i32, %c0_i32_0 : i32, i32
  }
  func.func @transform_4(%arg0: i32) -> (i32, i32) {
    %c0_i32 = arith.constant 0 : i32
    %c0_i32_0 = arith.constant 0 : i32
    %c0_i32_1 = arith.constant 0 : i32
    return %c0_i32, %c0_i32_0 : i32, i32
  }
  func.func @transform_5(%arg0: i32) -> (i32, i32) {
    %c0_i32 = arith.constant 0 : i32
    %c0_i32_0 = arith.constant 0 : i32
    %c0_i32_1 = arith.constant 0 : i32
    return %c0_i32, %c0_i32_0 : i32, i32
  }
  func.func @transform_6(%arg0: i32) -> (i32, i32) {
    %c0_i32 = arith.constant 0 : i32
    %c0_i32_0 = arith.constant 0 : i32
    %c0_i32_1 = arith.constant 0 : i32
    return %c0_i32, %c0_i32_0 : i32, i32
  }
  func.func @transform_7(%arg0: i32) -> (i32, i32) {
    %c0_i32 = arith.constant 0 : i32
    %c0_i32_0 = arith.constant 0 : i32
    %c0_i32_1 = arith.constant 0 : i32
    return %c0_i32, %c0_i32_0 : i32, i32
  }
  func.func @transform_8(%arg0: i32) -> (i32, i32) {
    %c0_i32 = arith.constant 0 : i32
    %c0_i32_0 = arith.constant 0 : i32
    %c0_i32_1 = arith.constant 0 : i32
    return %c0_i32, %c0_i32_0 : i32, i32
  }
  func.func @transform_9(%arg0: i32) -> (i32, i32) {
    %c0_i32 = arith.constant 0 : i32
    %c0_i32_0 = arith.constant 0 : i32
    return %arg0, %c0_i32 : i32, i32
  }
}

</mosaic_0001>

<llo_original>
// kernel: mlp_forward.1
$region0: #{mlp_forward.1}
  #allocation0 [shape = 'u32[]', space=smem, size = 0x4, offset = 0x4, fixed_abs, tag = 'smem constant byte address 0x4 - core index']
  #allocation1 [shape = 'u32[144,128]{1,0:T(1,128)}', space=vmem, size = 0x12000, scoped, tag = 'internal scratch']
  %s0 = inlined_call_operand.vmem [shape: f32[256,16], index: 0, kind: input, shape index: {}]
  %s1 = inlined_call_operand.vmem [shape: f32[16,128], index: 1, kind: input, shape index: {}]
  %s2 = inlined_call_operand.vmem [shape: f32[1,128], index: 2, kind: input, shape index: {}]
  %s3 = inlined_call_operand.hbm [shape: f32[128,128], index: 3, kind: input, shape index: {}]
  %s4 = inlined_call_operand.vmem [shape: f32[1,128], index: 4, kind: input, shape index: {}]
  %s5 = inlined_call_operand.vmem [shape: f32[128,128], index: 5, kind: input, shape index: {}]
  %s6 = inlined_call_operand.vmem [shape: f32[1,128], index: 6, kind: input, shape index: {}]
  %s7 = inlined_call_operand.vmem [shape: f32[128,8], index: 7, kind: input, shape index: {}]
  %s8 = inlined_call_operand.vmem [shape: f32[1,8], index: 8, kind: input, shape index: {}]
  %s9 = inlined_call_operand.vmem [shape: f32[256,8], index: 9, kind: output, shape index: {}]
  %s10 = sld [smem:[#allocation0]]
  $region50: #{mlp_forward.1} parent=0
    _
  %s12 = ssub.s32 1, %s10
  %s13 = scalar_select 0, %s12, %s10
  $region1: #{mlp_forward.1} parent=0
    #allocation2 [shape = 'u8[65536]{0}', space=vmem, size = 0x10000, scoped, tag = 'input window, operand 3, single buffered']
    #allocation3 [shape = 's32[1]{0}', space=sflag, size = 0x4, scoped, tag = 'scoped memory for mlp_forward.1']
    %14 = vsyncpa [#allocation3], 0
    // Predicated region
    $region2: #{mlp_forward.1} parent=1 // pred_check
      _
    $region3: #{mlp_forward.1} parent=1 // pred_check_branch
      %16 = sbr.rel (0) target = $region5
    $region4: #{mlp_forward.1} parent=1 // pred_region
      _
    $region5: #{mlp_forward.1} parent=1 // pred_fallthru
      _
    // Predicated region
    $region6: #{mlp_forward.1} parent=1 // pred_check
      _
    $region7: #{mlp_forward.1} parent=1 // pred_check_branch
      %18 = sbr.rel (0) target = $region9
    $region8: #{mlp_forward.1} parent=1 // pred_region
      _
    $region9: #{mlp_forward.1} parent=1 // pred_fallthru
      _
    // Predicated region
    $region10: #{mlp_forward.1} parent=1 // pred_check
      _
    $region11: #{mlp_forward.1} parent=1 // pred_check_branch
      %20 = sbr.rel (0) target = $region13
    $region12: #{mlp_forward.1} parent=1 // pred_region
      _
    $region13: #{mlp_forward.1} parent=1 // pred_fallthru
      _
    // Predicated region
    $region14: #{mlp_forward.1} parent=1 // pred_check
      _
    $region15: #{mlp_forward.1} parent=1 // pred_check_branch
      %22 = sbr.rel (0) target = $region17
    $region16: #{mlp_forward.1} parent=1 // pred_region
      %s24 = ssub.s32 2048, 2048
      %25 = vsyncadd [#allocation3], %s24
      %s26 = sshll.u32 [#allocation2], 4
      %s27 = int_to_ptr.vmem [resolvable:$true] %s26
      %32 = dma.hbm_to_vmem [thread:$0]  %s3, 2048, %s27, [#allocation3], 128, 128, 8
    $region17: #{mlp_forward.1} parent=1 // pred_fallthru
      _
    // Predicated region
    $region18: #{mlp_forward.1} parent=1 // pred_check
      _
    $region19: #{mlp_forward.1} parent=1 // pred_check_branch
      %34 = sbr.rel (0) target = $region21
    $region20: #{mlp_forward.1} parent=1 // pred_region
      _
    $region21: #{mlp_forward.1} parent=1 // pred_fallthru
      _
    // Predicated region
    $region22: #{mlp_forward.1} parent=1 // pred_check
      _
    $region23: #{mlp_forward.1} parent=1 // pred_check_branch
      %36 = sbr.rel (0) target = $region25
    $region24: #{mlp_forward.1} parent=1 // pred_region
      _
    $region25: #{mlp_forward.1} parent=1 // pred_fallthru
      _
    // Predicated region
    $region26: #{mlp_forward.1} parent=1 // pred_check
      _
    $region27: #{mlp_forward.1} parent=1 // pred_check_branch
      %38 = sbr.rel (0) target = $region29
    $region28: #{mlp_forward.1} parent=1 // pred_region
      _
    $region29: #{mlp_forward.1} parent=1 // pred_fallthru
      _
    // Predicated region
    $region30: #{mlp_forward.1} parent=1 // pred_check
      _
    $region31: #{mlp_forward.1} parent=1 // pred_check_branch
      %40 = sbr.rel (0) target = $region33
    $region32: #{mlp_forward.1} parent=1 // pred_region
      _
    $region33: #{mlp_forward.1} parent=1 // pred_fallthru
      _
    // Predicated region
    $region34: #{mlp_forward.1} parent=1 // pred_check
      _
    $region35: #{mlp_forward.1} parent=1 // pred_check_branch
      %42 = sbr.rel (0) target = $region37
    $region36: #{mlp_forward.1} parent=1 // pred_region
      _
    $region37: #{mlp_forward.1} parent=1 // pred_fallthru
      _
    // Predicated region
    $region38: #{mlp_forward.1} parent=1 // pred_check
      _
    $region39: #{mlp_forward.1} parent=1 // pred_check_branch
      %44 = sbr.rel (0) target = $region41
    $region40: #{mlp_forward.1} parent=1 // pred_region
      %45 = dma.done [#allocation3], 2048
    $region41: #{mlp_forward.1} parent=1 // pred_fallthru
      _
    %v46 = vld [vmem:[%s0] sm:$0xff]
    %v47 = vld [vmem:[%s0 + $0x8] sm:$0xff]
    %v48 = vld [vmem:[%s0 + $0x10] sm:$0xff]
    %v49 = vld [vmem:[%s0 + $0x18] sm:$0xff]
    %v50 = vld [vmem:[%s0 + $0x20] sm:$0xff]
    %v51 = vld [vmem:[%s0 + $0x28] sm:$0xff]
    %v52 = vld [vmem:[%s0 + $0x30] sm:$0xff]
    %v53 = vld [vmem:[%s0 + $0x38] sm:$0xff]
    %v54 = vld [vmem:[%s0 + $0x40] sm:$0xff]
    %v55 = vld [vmem:[%s0 + $0x48] sm:$0xff]
    %v56 = vld [vmem:[%s0 + $0x50] sm:$0xff]
    %v57 = vld [vmem:[%s0 + $0x58] sm:$0xff]
    %v58 = vld [vmem:[%s0 + $0x60] sm:$0xff]
    %v59 = vld [vmem:[%s0 + $0x68] sm:$0xff]
    %v60 = vld [vmem:[%s0 + $0x70] sm:$0xff]
    %v61 = vld [vmem:[%s0 + $0x78] sm:$0xff]
    %v62 = vld [vmem:[%s0 + $0x80] sm:$0xff]
    %v63 = vld [vmem:[%s0 + $0x88] sm:$0xff]
    %v64 = vld [vmem:[%s0 + $0x90] sm:$0xff]
    %v65 = vld [vmem:[%s0 + $0x98] sm:$0xff]
    %v66 = vld [vmem:[%s0 + $0xa0] sm:$0xff]
    %v67 = vld [vmem:[%s0 + $0xa8] sm:$0xff]
    %v68 = vld [vmem:[%s0 + $0xb0] sm:$0xff]
    %v69 = vld [vmem:[%s0 + $0xb8] sm:$0xff]
    %v70 = vld [vmem:[%s0 + $0xc0] sm:$0xff]
    %v71 = vld [vmem:[%s0 + $0xc8] sm:$0xff]
    %v72 = vld [vmem:[%s0 + $0xd0] sm:$0xff]
    %v73 = vld [vmem:[%s0 + $0xd8] sm:$0xff]
    %v74 = vld [vmem:[%s0 + $0xe0] sm:$0xff]
    %v75 = vld [vmem:[%s0 + $0xe8] sm:$0xff]
    %v76 = vld [vmem:[%s0 + $0xf0] sm:$0xff]
    %v77 = vld [vmem:[%s0 + $0xf8] sm:$0xff]
    %v78 = vld [vmem:[%s1] sm:$0xff]
    %v79 = vld [vmem:[%s1 + $0x8] sm:$0xff]
    %v80 = vld [vmem:[%s2] sm:$0x1]
    %v82 = vlaneseq
    %v83 = vshrl.u32 %v82, 7
    %v84 = vsub.s32 0, %v83
    %v85 = vrot.slane %v80, %v84
    %vm87 = vcmask 130048
    %v89 = vsel %vm87, %v46, 0
    %v92 = vsel %vm87, %v47, 0
    %v95 = vsel %vm87, %v48, 0
    %v98 = vsel %vm87, %v49, 0
    %v101 = vsel %vm87, %v50, 0
    %v104 = vsel %vm87, %v51, 0
    %v107 = vsel %vm87, %v52, 0
    %v110 = vsel %vm87, %v53, 0
    %v113 = vsel %vm87, %v54, 0
    %v116 = vsel %vm87, %v55, 0
    %v119 = vsel %vm87, %v56, 0
    %v122 = vsel %vm87, %v57, 0
    %v125 = vsel %vm87, %v58, 0
    %v128 = vsel %vm87, %v59, 0
    %v131 = vsel %vm87, %v60, 0
    %v134 = vsel %vm87, %v61, 0
    %v137 = vsel %vm87, %v62, 0
    %v140 = vsel %vm87, %v63, 0
    %v143 = vsel %vm87, %v64, 0
    %v146 = vsel %vm87, %v65, 0
    %v149 = vsel %vm87, %v66, 0
    %v152 = vsel %vm87, %v67, 0
    %v155 = vsel %vm87, %v68, 0
    %v158 = vsel %vm87, %v69, 0
    %v161 = vsel %vm87, %v70, 0
    %v164 = vsel %vm87, %v71, 0
    %v167 = vsel %vm87, %v72, 0
    %v170 = vsel %vm87, %v73, 0
    %v173 = vsel %vm87, %v74, 0
    %v176 = vsel %vm87, %v75, 0
    %v179 = vsel %vm87, %v76, 0
    %v182 = vsel %vm87, %v77, 0
    %184 = vmatprep.subr.mxu0 0.0
    %185 = vmatpush1.msra.mxu0 %v78
    %186 = vmatprep.subr.mxu0 0.0
    %187 = vmatpush1.msra.mxu0 %v79
    %188 = vmatprep.subr.mxu0 0.0
    %189 = vmatpush1.msra.mxu0 0.0
    %190 = vmatprep.subr.mxu0 0.0
    %191 = vmatpush1.msra.mxu0 0.0
    %192 = vmatprep.subr.mxu0 0.0
    %193 = vmatpush1.msra.mxu0 0.0
    %194 = vmatprep.subr.mxu0 0.0
    %195 = vmatpush1.msra.mxu0 0.0
    %196 = vmatprep.subr.mxu0 0.0
    %197 = vmatpush1.msra.mxu0 0.0
    %198 = vmatprep.subr.mxu0 0.0
    %199 = vmatpush1.msra.mxu0 0.0
    %200 = vmatprep.subr.mxu0 0.0
    %201 = vmatpush1.msra.mxu0 0.0
    %202 = vmatprep.subr.mxu0 0.0
    %203 = vmatpush1.msra.mxu0 0.0
    %204 = vmatprep.subr.mxu0 0.0
    %205 = vmatpush1.msra.mxu0 0.0
    %206 = vmatprep.subr.mxu0 0.0
    %207 = vmatpush1.msra.mxu0 0.0
    %208 = vmatprep.subr.mxu0 0.0
    %209 = vmatpush1.msra.mxu0 0.0
    %210 = vmatprep.subr.mxu0 0.0
    %211 = vmatpush1.msra.mxu0 0.0
    %212 = vmatprep.subr.mxu0 0.0
    %213 = vmatpush1.msra.mxu0 0.0
    %214 = vmatprep.subr.mxu0 0.0
    %215 = vmatpush1.msra.mxu0 0.0
    %216 = vmatprep.subr.mxu0 0.0
    %217 = vmatpush1.msra.mxu0 0.0
    %218 = vmatprep.subr.mxu0 0.0
    %219 = vmatpush1.msra.mxu0 0.0
    %220 = vmatprep.subr.mxu0 0.0
    %221 = vmatpush1.msra.mxu0 0.0
    %222 = vmatprep.subr.mxu0 0.0
    %223 = vmatpush1.msra.mxu0 0.0
    %224 = vmatprep.subr.mxu0 0.0
    %225 = vmatpush1.msra.mxu0 0.0
    %226 = vmatprep.subr.mxu0 0.0
    %227 = vmatpush1.msra.mxu0 0.0
    %228 = vmatprep.subr.mxu0 0.0
    %229 = vmatpush1.msra.mxu0 0.0
    %230 = vmatprep.subr.mxu0 0.0
    %231 = vmatpush1.msra.mxu0 0.0
    %232 = vmatprep.subr.mxu0 0.0
    %233 = vmatpush1.msra.mxu0 0.0
    %234 = vmatprep.subr.mxu0 0.0
    %235 = vmatpush1.msra.mxu0 0.0
    %236 = vmatprep.subr.mxu0 0.0
    %237 = vmatpush1.msra.mxu0 0.0
    %238 = vmatprep.subr.mxu0 0.0
    %239 = vmatpush1.msra.mxu0 0.0
    %240 = vmatprep.subr.mxu0 0.0
    %241 = vmatpush1.msra.mxu0 0.0
    %242 = vmatprep.subr.mxu0 0.0
    %243 = vmatpush1.msra.mxu0 0.0
    %244 = vmatprep.subr.mxu0 0.0
    %245 = vmatpush1.msra.mxu0 0.0
    %246 = vmatprep.subr.mxu0 0.0
    %247 = vmatpush1.msra.mxu0 0.0
    %248 = vmatprep.mubr.f32.mxu0 0.0
    %249 = vmatmul.mubr.f32.gmra.mrb[0].mxu0 %v89
    %v250 = vpop.f32.mrb[0].mxu0
    %v251 = vadd.f32 %v85, %v250
    %v252 = vpop.f32.mrb[0].mxu0
    %253 = vmatprep.mubr.f32.mxu0 0.0
    %254 = vmatmul.mubr.f32.gmra.mrb[0].mxu0 %v92
    %v255 = vpop.f32.mrb[0].mxu0
    %v256 = vadd.f32 %v85, %v255
    %v257 = vpop.f32.mrb[0].mxu0
    %258 = vmatprep.mubr.f32.mxu0 0.0
    %259 = vmatmul.mubr.f32.gmra.mrb[0].mxu0 %v95
    %v260 = vpop.f32.mrb[0].mxu0
    %v261 = vadd.f32 %v85, %v260
    %v262 = vpop.f32.mrb[0].mxu0
    %263 = vmatprep.mubr.f32.mxu0 0.0
    %264 = vmatmul.mubr.f32.gmra.mrb[0].mxu0 %v98
    %v265 = vpop.f32.mrb[0].mxu0
    %v266 = vadd.f32 %v85, %v265
    %v267 = vpop.f32.mrb[0].mxu0
    %268 = vmatprep.mubr.f32.mxu0 0.0
    %269 = vmatmul.mubr.f32.gmra.mrb[0].mxu0 %v101
    %v270 = vpop.f32.mrb[0].mxu0
    %v271 = vadd.f32 %v85, %v270
    %v272 = vpop.f32.mrb[0].mxu0
    %273 = vmatprep.mubr.f32.mxu0 0.0
    %274 = vmatmul.mubr.f32.gmra.mrb[0].mxu0 %v104
    %v275 = vpop.f32.mrb[0].mxu0
    %v276 = vadd.f32 %v85, %v275
    %v277 = vpop.f32.mrb[0].mxu0
    %278 = vmatprep.mubr.f32.mxu0 0.0
    %279 = vmatmul.mubr.f32.gmra.mrb[0].mxu0 %v107
    %v280 = vpop.f32.mrb[0].mxu0
    %v281 = vadd.f32 %v85, %v280
    %v282 = vpop.f32.mrb[0].mxu0
    %283 = vmatprep.mubr.f32.mxu0 0.0
    %284 = vmatmul.mubr.f32.gmra.mrb[0].mxu0 %v110
    %v285 = vpop.f32.mrb[0].mxu0
    %v286 = vadd.f32 %v85, %v285
    %v287 = vpop.f32.mrb[0].mxu0
    %288 = vmatprep.mubr.f32.mxu0 0.0
    %289 = vmatmul.mubr.f32.gmra.mrb[0].mxu0 %v113
    %v290 = vpop.f32.mrb[0].mxu0
    %v291 = vadd.f32 %v85, %v290
    %v292 = vpop.f32.mrb[0].mxu0
    %293 = vmatprep.mubr.f32.mxu0 0.0
    %294 = vmatmul.mubr.f32.gmra.mrb[0].mxu0 %v116
    %v295 = vpop.f32.mrb[0].mxu0
    %v296 = vadd.f32 %v85, %v295
    %v297 = vpop.f32.mrb[0].mxu0
    %298 = vmatprep.mubr.f32.mxu0 0.0
    %299 = vmatmul.mubr.f32.gmra.mrb[0].mxu0 %v119
    %v300 = vpop.f32.mrb[0].mxu0
    %v301 = vadd.f32 %v85, %v300
    %v302 = vpop.f32.mrb[0].mxu0
    %303 = vmatprep.mubr.f32.mxu0 0.0
    %304 = vmatmul.mubr.f32.gmra.mrb[0].mxu0 %v122
    %v305 = vpop.f32.mrb[0].mxu0
    %v306 = vadd.f32 %v85, %v305
    %v307 = vpop.f32.mrb[0].mxu0
    %308 = vmatprep.mubr.f32.mxu0 0.0
    %309 = vmatmul.mubr.f32.gmra.mrb[0].mxu0 %v125
    %v310 = vpop.f32.mrb[0].mxu0
    %v311 = vadd.f32 %v85, %v310
    %v312 = vpop.f32.mrb[0].mxu0
    %313 = vmatprep.mubr.f32.mxu0 0.0
    %314 = vmatmul.mubr.f32.gmra.mrb[0].mxu0 %v128
    %v315 = vpop.f32.mrb[0].mxu0
    %v316 = vadd.f32 %v85, %v315
    %v317 = vpop.f32.mrb[0].mxu0
    %318 = vmatprep.mubr.f32.mxu0 0.0
    %319 = vmatmul.mubr.f32.gmra.mrb[0].mxu0 %v131
    %v320 = vpop.f32.mrb[0].mxu0
    %v321 = vadd.f32 %v85, %v320
    %v322 = vpop.f32.mrb[0].mxu0
    %323 = vmatprep.mubr.f32.mxu0 0.0
    %324 = vmatmul.mubr.f32.gmra.mrb[0].mxu0 %v134
    %v325 = vpop.f32.mrb[0].mxu0
    %v326 = vadd.f32 %v85, %v325
    %v327 = vpop.f32.mrb[0].mxu0
    %328 = vmatprep.mubr.f32.mxu0 0.0
    %329 = vmatmul.mubr.f32.gmra.mrb[0].mxu0 %v137
    %v330 = vpop.f32.mrb[0].mxu0
    %v331 = vadd.f32 %v85, %v330
    %v332 = vpop.f32.mrb[0].mxu0
    %333 = vmatprep.mubr.f32.mxu0 0.0
    %334 = vmatmul.mubr.f32.gmra.mrb[0].mxu0 %v140
    %v335 = vpop.f32.mrb[0].mxu0
    %v336 = vadd.f32 %v85, %v335
    %v337 = vpop.f32.mrb[0].mxu0
    %338 = vmatprep.mubr.f32.mxu0 0.0
    %339 = vmatmul.mubr.f32.gmra.mrb[0].mxu0 %v143
    %v340 = vpop.f32.mrb[0].mxu0
    %v341 = vadd.f32 %v85, %v340
    %v342 = vpop.f32.mrb[0].mxu0
    %343 = vmatprep.mubr.f32.mxu0 0.0
    %344 = vmatmul.mubr.f32.gmra.mrb[0].mxu0 %v146
    %v345 = vpop.f32.mrb[0].mxu0
    %v346 = vadd.f32 %v85, %v345
    %v347 = vpop.f32.mrb[0].mxu0
    %348 = vmatprep.mubr.f32.mxu0 0.0
    %349 = vmatmul.mubr.f32.gmra.mrb[0].mxu0 %v149
    %v350 = vpop.f32.mrb[0].mxu0
    %v351 = vadd.f32 %v85, %v350
    %v352 = vpop.f32.mrb[0].mxu0
    %353 = vmatprep.mubr.f32.mxu0 0.0
    %354 = vmatmul.mubr.f32.gmra.mrb[0].mxu0 %v152
    %v355 = vpop.f32.mrb[0].mxu0
    %v356 = vadd.f32 %v85, %v355
    %v357 = vpop.f32.mrb[0].mxu0
    %358 = vmatprep.mubr.f32.mxu0 0.0
    %359 = vmatmul.mubr.f32.gmra.mrb[0].mxu0 %v155
    %v360 = vpop.f32.mrb[0].mxu0
    %v361 = vadd.f32 %v85, %v360
    %v362 = vpop.f32.mrb[0].mxu0
    %363 = vmatprep.mubr.f32.mxu0 0.0
    %364 = vmatmul.mubr.f32.gmra.mrb[0].mxu0 %v158
    %v365 = vpop.f32.mrb[0].mxu0
    %v366 = vadd.f32 %v85, %v365
    %v367 = vpop.f32.mrb[0].mxu0
    %368 = vmatprep.mubr.f32.mxu0 0.0
    %369 = vmatmul.mubr.f32.gmra.mrb[0].mxu0 %v161
    %v370 = vpop.f32.mrb[0].mxu0
    %v371 = vadd.f32 %v85, %v370
    %v372 = vpop.f32.mrb[0].mxu0
    %373 = vmatprep.mubr.f32.mxu0 0.0
    %374 = vmatmul.mubr.f32.gmra.mrb[0].mxu0 %v164
    %v375 = vpop.f32.mrb[0].mxu0
    %v376 = vadd.f32 %v85, %v375
    %v377 = vpop.f32.mrb[0].mxu0
    %378 = vmatprep.mubr.f32.mxu0 0.0
    %379 = vmatmul.mubr.f32.gmra.mrb[0].mxu0 %v167
    %v380 = vpop.f32.mrb[0].mxu0
    %v381 = vadd.f32 %v85, %v380
    %v382 = vpop.f32.mrb[0].mxu0
    %383 = vmatprep.mubr.f32.mxu0 0.0
    %384 = vmatmul.mubr.f32.gmra.mrb[0].mxu0 %v170
    %v385 = vpop.f32.mrb[0].mxu0
    %v386 = vadd.f32 %v85, %v385
    %v387 = vpop.f32.mrb[0].mxu0
    %388 = vmatprep.mubr.f32.mxu0 0.0
    %389 = vmatmul.mubr.f32.gmra.mrb[0].mxu0 %v173
    %v390 = vpop.f32.mrb[0].mxu0
    %v391 = vadd.f32 %v85, %v390
    %v392 = vpop.f32.mrb[0].mxu0
    %393 = vmatprep.mubr.f32.mxu0 0.0
    %394 = vmatmul.mubr.f32.gmra.mrb[0].mxu0 %v176
    %v395 = vpop.f32.mrb[0].mxu0
    %v396 = vadd.f32 %v85, %v395
    %v397 = vpop.f32.mrb[0].mxu0
    %398 = vmatprep.mubr.f32.mxu0 0.0
    %399 = vmatmul.mubr.f32.gmra.mrb[0].mxu0 %v179
    %v400 = vpop.f32.mrb[0].mxu0
    %v401 = vadd.f32 %v85, %v400
    %v402 = vpop.f32.mrb[0].mxu0
    %403 = vmatprep.mubr.f32.mxu0 0.0
    %404 = vmatmul.mubr.f32.gmra.mrb[0].mxu0 %v182
    %v405 = vpop.f32.mrb[0].mxu0
    %v406 = vadd.f32 %v85, %v405
    %v407 = vpop.f32.mrb[0].mxu0
    %408 = vdwg.mxu0
    %v409 = vmax.f32 %v251, 0.0
    %v410 = vmax.f32 %v256, 0.0
    %v411 = vmax.f32 %v261, 0.0
    %v412 = vmax.f32 %v266, 0.0
    %v413 = vmax.f32 %v271, 0.0
    %v414 = vmax.f32 %v276, 0.0
    %v415 = vmax.f32 %v281, 0.0
    %v416 = vmax.f32 %v286, 0.0
    %v417 = vmax.f32 %v291, 0.0
    %v418 = vmax.f32 %v296, 0.0
    %v419 = vmax.f32 %v301, 0.0
    %v420 = vmax.f32 %v306, 0.0
    %v421 = vmax.f32 %v311, 0.0
    %v422 = vmax.f32 %v316, 0.0
    %v423 = vmax.f32 %v321, 0.0
    %v424 = vmax.f32 %v326, 0.0
    %v425 = vmax.f32 %v331, 0.0
    %v426 = vmax.f32 %v336, 0.0
    %v427 = vmax.f32 %v341, 0.0
    %v428 = vmax.f32 %v346, 0.0
    %v429 = vmax.f32 %v351, 0.0
    %v430 = vmax.f32 %v356, 0.0
    %v431 = vmax.f32 %v361, 0.0
    %v432 = vmax.f32 %v366, 0.0
    %v433 = vmax.f32 %v371, 0.0
    %v434 = vmax.f32 %v376, 0.0
    %v435 = vmax.f32 %v381, 0.0
    %v436 = vmax.f32 %v386, 0.0
    %v437 = vmax.f32 %v391, 0.0
    %v438 = vmax.f32 %v396, 0.0
    %v439 = vmax.f32 %v401, 0.0
    %v440 = vmax.f32 %v406, 0.0
    %v441 = vld [vmem:[#allocation2] sm:$0xff]
    %v442 = vld [vmem:[#allocation2 + $0x8] sm:$0xff]
    %v443 = vld [vmem:[#allocation2 + $0x10] sm:$0xff]
    %v444 = vld [vmem:[#allocation2 + $0x18] sm:$0xff]
    %v445 = vld [vmem:[#allocation2 + $0x20] sm:$0xff]
    %v446 = vld [vmem:[#allocation2 + $0x28] sm:$0xff]
    %v447 = vld [vmem:[#allocation2 + $0x30] sm:$0xff]
    %v448 = vld [vmem:[#allocation2 + $0x38] sm:$0xff]
    %v449 = vld [vmem:[#allocation2 + $0x40] sm:$0xff]
    %v450 = vld [vmem:[#allocation2 + $0x48] sm:$0xff]
    %v451 = vld [vmem:[#allocation2 + $0x50] sm:$0xff]
    %v452 = vld [vmem:[#allocation2 + $0x58] sm:$0xff]
    %v453 = vld [vmem:[#allocation2 + $0x60] sm:$0xff]
    %v454 = vld [vmem:[#allocation2 + $0x68] sm:$0xff]
    %v455 = vld [vmem:[#allocation2 + $0x70] sm:$0xff]
    %v456 = vld [vmem:[#allocation2 + $0x78] sm:$0xff]
    %v457 = vld [vmem:[%s4] sm:$0x1]
    %v459 = vlaneseq
    %v460 = vshrl.u32 %v459, 7
    %v461 = vsub.s32 0, %v460
    %v462 = vrot.slane %v457, %v461
    %464 = vmatprep.subr.mxu0 0.0
    %465 = vmatpush1.msra.mxu0 %v441
    %466 = vmatprep.subr.mxu0 0.0
    %467 = vmatpush1.msra.mxu0 %v442
    %468 = vmatprep.subr.mxu0 0.0
    %469 = vmatpush1.msra.mxu0 %v443
    %470 = vmatprep.subr.mxu0 0.0
    %471 = vmatpush1.msra.mxu0 %v444
    %472 = vmatprep.subr.mxu0 0.0
    %473 = vmatpush1.msra.mxu0 %v445
    %474 = vmatprep.subr.mxu0 0.0
    %475 = vmatpush1.msra.mxu0 %v446
    %476 = vmatprep.subr.mxu0 0.0
    %477 = vmatpush1.msra.mxu0 %v447
    %478 = vmatprep.subr.mxu0 0.0
    %479 = vmatpush1.msra.mxu0 %v448
    %480 = vmatprep.subr.mxu0 0.0
    %481 = vmatpush1.msra.mxu0 %v449
    %482 = vmatprep.subr.mxu0 0.0
    %483 = vmatpush1.msra.mxu0 %v450
    %484 = vmatprep.subr.mxu0 0.0
    %485 = vmatpush1.msra.mxu0 %v451
    %486 = vmatprep.subr.mxu0 0.0
    %487 = vmatpush1.msra.mxu0 %v452
    %488 = vmatprep.subr.mxu0 0.0
    %489 = vmatpush1.msra.mxu0 %v453
    %490 = vmatprep.subr.mxu0 0.0
    %491 = vmatpush1.msra.mxu0 %v454
    %492 = vmatprep.subr.mxu0 0.0
    %493 = vmatpush1.msra.mxu0 %v455
    %494 = vmatprep.subr.mxu0 0.0
    %495 = vmatpush1.msra.mxu0 %v456
    %496 = vmatprep.subr.mxu0 0.0
    %497 = vmatpush1.msra.mxu0 0.0
    %498 = vmatprep.subr.mxu0 0.0
    %499 = vmatpush1.msra.mxu0 0.0
    %500 = vmatprep.subr.mxu0 0.0
    %501 = vmatpush1.msra.mxu0 0.0
    %502 = vmatprep.subr.mxu0 0.0
    %503 = vmatpush1.msra.mxu0 0.0
    %504 = vmatprep.subr.mxu0 0.0
    %505 = vmatpush1.msra.mxu0 0.0
    %506 = vmatprep.subr.mxu0 0.0
    %507 = vmatpush1.msra.mxu0 0.0
    %508 = vmatprep.subr.mxu0 0.0
    %509 = vmatpush1.msra.mxu0 0.0
    %510 = vmatprep.subr.mxu0 0.0
    %511 = vmatpush1.msra.mxu0 0.0
    %512 = vmatprep.subr.mxu0 0.0
    %513 = vmatpush1.msra.mxu0 0.0
    %514 = vmatprep.subr.mxu0 0.0
    %515 = vmatpush1.msra.mxu0 0.0
    %516 = vmatprep.subr.mxu0 0.0
    %517 = vmatpush1.msra.mxu0 0.0
    %518 = vmatprep.subr.mxu0 0.0
    %519 = vmatpush1.msra.mxu0 0.0
    %520 = vmatprep.subr.mxu0 0.0
    %521 = vmatpush1.msra.mxu0 0.0
    %522 = vmatprep.subr.mxu0 0.0
    %523 = vmatpush1.msra.mxu0 0.0
    %524 = vmatprep.subr.mxu0 0.0
    %525 = vmatpush1.msra.mxu0 0.0
    %526 = vmatprep.subr.mxu0 0.0
    %527 = vmatpush1.msra.mxu0 0.0
    %528 = vmatprep.mubr.f32.mxu0 0.0
    %529 = vmatmul.mubr.f32.gmra.mrb[0].mxu0 %v409
    %v530 = vpop.f32.mrb[0].mxu0
    %v531 = vadd.f32 %v462, %v530
    %v532 = vpop.f32.mrb[0].mxu0
    %533 = vmatprep.mubr.f32.mxu0 0.0
    %534 = vmatmul.mubr.f32.gmra.mrb[0].mxu0 %v410
    %v535 = vpop.f32.mrb[0].mxu0
    %v536 = vadd.f32 %v462, %v535
    %v537 = vpop.f32.mrb[0].mxu0
    %538 = vmatprep.mubr.f32.mxu0 0.0
    %539 = vmatmul.mubr.f32.gmra.mrb[0].mxu0 %v411
    %v540 = vpop.f32.mrb[0].mxu0
    %v541 = vadd.f32 %v462, %v540
    %v542 = vpop.f32.mrb[0].mxu0
    %543 = vmatprep.mubr.f32.mxu0 0.0
    %544 = vmatmul.mubr.f32.gmra.mrb[0].mxu0 %v412
    %v545 = vpop.f32.mrb[0].mxu0
    %v546 = vadd.f32 %v462, %v545
    %v547 = vpop.f32.mrb[0].mxu0
    %548 = vmatprep.mubr.f32.mxu0 0.0
    %549 = vmatmul.mubr.f32.gmra.mrb[0].mxu0 %v413
    %v550 = vpop.f32.mrb[0].mxu0
    %v551 = vadd.f32 %v462, %v550
    %v552 = vpop.f32.mrb[0].mxu0
    %553 = vmatprep.mubr.f32.mxu0 0.0
    %554 = vmatmul.mubr.f32.gmra.mrb[0].mxu0 %v414
    %v555 = vpop.f32.mrb[0].mxu0
    %v556 = vadd.f32 %v462, %v555
    %v557 = vpop.f32.mrb[0].mxu0
    %558 = vmatprep.mubr.f32.mxu0 0.0
    %559 = vmatmul.mubr.f32.gmra.mrb[0].mxu0 %v415
    %v560 = vpop.f32.mrb[0].mxu0
    %v561 = vadd.f32 %v462, %v560
    %v562 = vpop.f32.mrb[0].mxu0
    %563 = vmatprep.mubr.f32.mxu0 0.0
    %564 = vmatmul.mubr.f32.gmra.mrb[0].mxu0 %v416
    %v565 = vpop.f32.mrb[0].mxu0
    %v566 = vadd.f32 %v462, %v565
    %v567 = vpop.f32.mrb[0].mxu0
    %568 = vmatprep.mubr.f32.mxu0 0.0
    %569 = vmatmul.mubr.f32.gmra.mrb[0].mxu0 %v417
    %v570 = vpop.f32.mrb[0].mxu0
    %v571 = vadd.f32 %v462, %v570
    %v572 = vpop.f32.mrb[0].mxu0
    %573 = vmatprep.mubr.f32.mxu0 0.0
    %574 = vmatmul.mubr.f32.gmra.mrb[0].mxu0 %v418
    %v575 = vpop.f32.mrb[0].mxu0
    %v576 = vadd.f32 %v462, %v575
    %v577 = vpop.f32.mrb[0].mxu0
    %578 = vmatprep.mubr.f32.mxu0 0.0
    %579 = vmatmul.mubr.f32.gmra.mrb[0].mxu0 %v419
    %v580 = vpop.f32.mrb[0].mxu0
    %v581 = vadd.f32 %v462, %v580
    %v582 = vpop.f32.mrb[0].mxu0
    %583 = vmatprep.mubr.f32.mxu0 0.0
    %584 = vmatmul.mubr.f32.gmra.mrb[0].mxu0 %v420
    %v585 = vpop.f32.mrb[0].mxu0
    %v586 = vadd.f32 %v462, %v585
    %v587 = vpop.f32.mrb[0].mxu0
    %588 = vmatprep.mubr.f32.mxu0 0.0
    %589 = vmatmul.mubr.f32.gmra.mrb[0].mxu0 %v421
    %v590 = vpop.f32.mrb[0].mxu0
    %v591 = vadd.f32 %v462, %v590
    %v592 = vpop.f32.mrb[0].mxu0
    %593 = vmatprep.mubr.f32.mxu0 0.0
    %594 = vmatmul.mubr.f32.gmra.mrb[0].mxu0 %v422
    %v595 = vpop.f32.mrb[0].mxu0
    %v596 = vadd.f32 %v462, %v595
    %v597 = vpop.f32.mrb[0].mxu0
    %598 = vmatprep.mubr.f32.mxu0 0.0
    %599 = vmatmul.mubr.f32.gmra.mrb[0].mxu0 %v423
    %v600 = vpop.f32.mrb[0].mxu0
    %v601 = vadd.f32 %v462, %v600
    %v602 = vpop.f32.mrb[0].mxu0
    %603 = vmatprep.mubr.f32.mxu0 0.0
    %604 = vmatmul.mubr.f32.gmra.mrb[0].mxu0 %v424
    %v605 = vpop.f32.mrb[0].mxu0
    %v606 = vadd.f32 %v462, %v605
    %v607 = vpop.f32.mrb[0].mxu0
    %608 = vmatprep.mubr.f32.mxu0 0.0
    %609 = vmatmul.mubr.f32.gmra.mrb[0].mxu0 %v425
    %v610 = vpop.f32.mrb[0].mxu0
    %v611 = vadd.f32 %v462, %v610
    %v612 = vpop.f32.mrb[0].mxu0
    %613 = vmatprep.mubr.f32.mxu0 0.0
    %614 = vmatmul.mubr.f32.gmra.mrb[0].mxu0 %v426
    %v615 = vpop.f32.mrb[0].mxu0
    %v616 = vadd.f32 %v462, %v615
    %v617 = vpop.f32.mrb[0].mxu0
    %618 = vmatprep.mubr.f32.mxu0 0.0
    %619 = vmatmul.mubr.f32.gmra.mrb[0].mxu0 %v427
    %v620 = vpop.f32.mrb[0].mxu0
    %v621 = vadd.f32 %v462, %v620
    %v622 = vpop.f32.mrb[0].mxu0
    %623 = vmatprep.mubr.f32.mxu0 0.0
    %624 = vmatmul.mubr.f32.gmra.mrb[0].mxu0 %v428
    %v625 = vpop.f32.mrb[0].mxu0
    %v626 = vadd.f32 %v462, %v625
    %v627 = vpop.f32.mrb[0].mxu0
    %628 = vmatprep.mubr.f32.mxu0 0.0
    %629 = vmatmul.mubr.f32.gmra.mrb[0].mxu0 %v429
    %v630 = vpop.f32.mrb[0].mxu0
    %v631 = vadd.f32 %v462, %v630
    %v632 = vpop.f32.mrb[0].mxu0
    %633 = vmatprep.mubr.f32.mxu0 0.0
    %634 = vmatmul.mubr.f32.gmra.mrb[0].mxu0 %v430
    %v635 = vpop.f32.mrb[0].mxu0
    %v636 = vadd.f32 %v462, %v635
    %v637 = vpop.f32.mrb[0].mxu0
    %638 = vmatprep.mubr.f32.mxu0 0.0
    %639 = vmatmul.mubr.f32.gmra.mrb[0].mxu0 %v431
    %v640 = vpop.f32.mrb[0].mxu0
    %v641 = vadd.f32 %v462, %v640
    %v642 = vpop.f32.mrb[0].mxu0
    %643 = vmatprep.mubr.f32.mxu0 0.0
    %644 = vmatmul.mubr.f32.gmra.mrb[0].mxu0 %v432
    %v645 = vpop.f32.mrb[0].mxu0
    %v646 = vadd.f32 %v462, %v645
    %v647 = vpop.f32.mrb[0].mxu0
    %648 = vmatprep.mubr.f32.mxu0 0.0
    %649 = vmatmul.mubr.f32.gmra.mrb[0].mxu0 %v433
    %v650 = vpop.f32.mrb[0].mxu0
    %v651 = vadd.f32 %v462, %v650
    %v652 = vpop.f32.mrb[0].mxu0
    %653 = vmatprep.mubr.f32.mxu0 0.0
    %654 = vmatmul.mubr.f32.gmra.mrb[0].mxu0 %v434
    %v655 = vpop.f32.mrb[0].mxu0
    %v656 = vadd.f32 %v462, %v655
    %v657 = vpop.f32.mrb[0].mxu0
    %658 = vmatprep.mubr.f32.mxu0 0.0
    %659 = vmatmul.mubr.f32.gmra.mrb[0].mxu0 %v435
    %v660 = vpop.f32.mrb[0].mxu0
    %v661 = vadd.f32 %v462, %v660
    %v662 = vpop.f32.mrb[0].mxu0
    %663 = vmatprep.mubr.f32.mxu0 0.0
    %664 = vmatmul.mubr.f32.gmra.mrb[0].mxu0 %v436
    %v665 = vpop.f32.mrb[0].mxu0
    %v666 = vadd.f32 %v462, %v665
    %v667 = vpop.f32.mrb[0].mxu0
    %668 = vmatprep.mubr.f32.mxu0 0.0
    %669 = vmatmul.mubr.f32.gmra.mrb[0].mxu0 %v437
    %v670 = vpop.f32.mrb[0].mxu0
    %v671 = vadd.f32 %v462, %v670
    %v672 = vpop.f32.mrb[0].mxu0
    %673 = vmatprep.mubr.f32.mxu0 0.0
    %674 = vmatmul.mubr.f32.gmra.mrb[0].mxu0 %v438
    %v675 = vpop.f32.mrb[0].mxu0
    %v676 = vadd.f32 %v462, %v675
    %v677 = vpop.f32.mrb[0].mxu0
    %678 = vmatprep.mubr.f32.mxu0 0.0
    %679 = vmatmul.mubr.f32.gmra.mrb[0].mxu0 %v439
    %v680 = vpop.f32.mrb[0].mxu0
    %v681 = vadd.f32 %v462, %v680
    %v682 = vpop.f32.mrb[0].mxu0
    %683 = vmatprep.mubr.f32.mxu0 0.0
    %684 = vmatmul.mubr.f32.gmra.mrb[0].mxu0 %v440
    %v685 = vpop.f32.mrb[0].mxu0
    %v686 = vadd.f32 %v462, %v685
    %v687 = vpop.f32.mrb[0].mxu0
    %688 = vdwg.mxu0
    %v689 = vmax.f32 %v531, 0.0
    %v690 = vmax.f32 %v536, 0.0
    %v691 = vmax.f32 %v541, 0.0
    %v692 = vmax.f32 %v546, 0.0
    %v693 = vmax.f32 %v551, 0.0
    %v694 = vmax.f32 %v556, 0.0
    %v695 = vmax.f32 %v561, 0.0
    %v696 = vmax.f32 %v566, 0.0
    %v697 = vmax.f32 %v571, 0.0
    %v698 = vmax.f32 %v576, 0.0
    %v699 = vmax.f32 %v581, 0.0
    %v700 = vmax.f32 %v586, 0.0
    %v701 = vmax.f32 %v591, 0.0
    %v702 = vmax.f32 %v596, 0.0
    %v703 = vmax.f32 %v601, 0.0
    %v704 = vmax.f32 %v606, 0.0
    %v705 = vmax.f32 %v611, 0.0
    %v706 = vmax.f32 %v616, 0.0
    %v707 = vmax.f32 %v621, 0.0
    %v708 = vmax.f32 %v626, 0.0
    %v709 = vmax.f32 %v631, 0.0
    %v710 = vmax.f32 %v636, 0.0
    %v711 = vmax.f32 %v641, 0.0
    %v712 = vmax.f32 %v646, 0.0
    %v713 = vmax.f32 %v651, 0.0
    %v714 = vmax.f32 %v656, 0.0
    %v715 = vmax.f32 %v661, 0.0
    %v716 = vmax.f32 %v666, 0.0
    %v717 = vmax.f32 %v671, 0.0
    %v718 = vmax.f32 %v676, 0.0
    %v719 = vmax.f32 %v681, 0.0
    %v720 = vmax.f32 %v686, 0.0
    %v721 = vld [vmem:[%s5] sm:$0xff]
    %v722 = vld [vmem:[%s5 + $0x8] sm:$0xff]
    %v723 = vld [vmem:[%s5 + $0x10] sm:$0xff]
    %v724 = vld [vmem:[%s5 + $0x18] sm:$0xff]
    %v725 = vld [vmem:[%s5 + $0x20] sm:$0xff]
    %v726 = vld [vmem:[%s5 + $0x28] sm:$0xff]
    %v727 = vld [vmem:[%s5 + $0x30] sm:$0xff]
    %v728 = vld [vmem:[%s5 + $0x38] sm:$0xff]
    %v729 = vld [vmem:[%s5 + $0x40] sm:$0xff]
    %v730 = vld [vmem:[%s5 + $0x48] sm:$0xff]
    %v731 = vld [vmem:[%s5 + $0x50] sm:$0xff]
    %v732 = vld [vmem:[%s5 + $0x58] sm:$0xff]
    %v733 = vld [vmem:[%s5 + $0x60] sm:$0xff]
    %v734 = vld [vmem:[%s5 + $0x68] sm:$0xff]
    %v735 = vld [vmem:[%s5 + $0x70] sm:$0xff]
    %v736 = vld [vmem:[%s5 + $0x78] sm:$0xff]
    %v737 = vld [vmem:[%s6] sm:$0x1]
    %v739 = vlaneseq
    %v740 = vshrl.u32 %v739, 7
    %v741 = vsub.s32 0, %v740
    %v742 = vrot.slane %v737, %v741
    %744 = vmatprep.subr.mxu0 0.0
    %745 = vmatpush1.msra.mxu0 %v721
    %746 = vmatprep.subr.mxu0 0.0
    %747 = vmatpush1.msra.mxu0 %v722
    %748 = vmatprep.subr.mxu0 0.0
    %749 = vmatpush1.msra.mxu0 %v723
    %750 = vmatprep.subr.mxu0 0.0
    %751 = vmatpush1.msra.mxu0 %v724
    %752 = vmatprep.subr.mxu0 0.0
    %753 = vmatpush1.msra.mxu0 %v725
    %754 = vmatprep.subr.mxu0 0.0
    %755 = vmatpush1.msra.mxu0 %v726
    %756 = vmatprep.subr.mxu0 0.0
    %757 = vmatpush1.msra.mxu0 %v727
    %758 = vmatprep.subr.mxu0 0.0
    %759 = vmatpush1.msra.mxu0 %v728
    %760 = vmatprep.subr.mxu0 0.0
    %761 = vmatpush1.msra.mxu0 %v729
    %762 = vmatprep.subr.mxu0 0.0
    %763 = vmatpush1.msra.mxu0 %v730
    %764 = vmatprep.subr.mxu0 0.0
    %765 = vmatpush1.msra.mxu0 %v731
    %766 = vmatprep.subr.mxu0 0.0
    %767 = vmatpush1.msra.mxu0 %v732
    %768 = vmatprep.subr.mxu0 0.0
    %769 = vmatpush1.msra.mxu0 %v733
    %770 = vmatprep.subr.mxu0 0.0
    %771 = vmatpush1.msra.mxu0 %v734
    %772 = vmatprep.subr.mxu0 0.0
    %773 = vmatpush1.msra.mxu0 %v735
    %774 = vmatprep.subr.mxu0 0.0
    %775 = vmatpush1.msra.mxu0 %v736
    %776 = vmatprep.subr.mxu0 0.0
    %777 = vmatpush1.msra.mxu0 0.0
    %778 = vmatprep.subr.mxu0 0.0
    %779 = vmatpush1.msra.mxu0 0.0
    %780 = vmatprep.subr.mxu0 0.0
    %781 = vmatpush1.msra.mxu0 0.0
    %782 = vmatprep.subr.mxu0 0.0
    %783 = vmatpush1.msra.mxu0 0.0
    %784 = vmatprep.subr.mxu0 0.0
    %785 = vmatpush1.msra.mxu0 0.0
    %786 = vmatprep.subr.mxu0 0.0
    %787 = vmatpush1.msra.mxu0 0.0
    %788 = vmatprep.subr.mxu0 0.0
    %789 = vmatpush1.msra.mxu0 0.0
    %790 = vmatprep.subr.mxu0 0.0
    %791 = vmatpush1.msra.mxu0 0.0
    %792 = vmatprep.subr.mxu0 0.0
    %793 = vmatpush1.msra.mxu0 0.0
    %794 = vmatprep.subr.mxu0 0.0
    %795 = vmatpush1.msra.mxu0 0.0
    %796 = vmatprep.subr.mxu0 0.0
    %797 = vmatpush1.msra.mxu0 0.0
    %798 = vmatprep.subr.mxu0 0.0
    %799 = vmatpush1.msra.mxu0 0.0
    %800 = vmatprep.subr.mxu0 0.0
    %801 = vmatpush1.msra.mxu0 0.0
    %802 = vmatprep.subr.mxu0 0.0
    %803 = vmatpush1.msra.mxu0 0.0
    %804 = vmatprep.subr.mxu0 0.0
    %805 = vmatpush1.msra.mxu0 0.0
    %806 = vmatprep.subr.mxu0 0.0
    %807 = vmatpush1.msra.mxu0 0.0
    %808 = vmatprep.mubr.f32.mxu0 0.0
    %809 = vmatmul.mubr.f32.gmra.mrb[0].mxu0 %v689
    %v810 = vpop.f32.mrb[0].mxu0
    %v811 = vadd.f32 %v742, %v810
    %v812 = vpop.f32.mrb[0].mxu0
    %813 = vmatprep.mubr.f32.mxu0 0.0
    %814 = vmatmul.mubr.f32.gmra.mrb[0].mxu0 %v690
    %v815 = vpop.f32.mrb[0].mxu0
    %v816 = vadd.f32 %v742, %v815
    %v817 = vpop.f32.mrb[0].mxu0
    %818 = vmatprep.mubr.f32.mxu0 0.0
    %819 = vmatmul.mubr.f32.gmra.mrb[0].mxu0 %v691
    %v820 = vpop.f32.mrb[0].mxu0
    %v821 = vadd.f32 %v742, %v820
    %v822 = vpop.f32.mrb[0].mxu0
    %823 = vmatprep.mubr.f32.mxu0 0.0
    %824 = vmatmul.mubr.f32.gmra.mrb[0].mxu0 %v692
    %v825 = vpop.f32.mrb[0].mxu0
    %v826 = vadd.f32 %v742, %v825
    %v827 = vpop.f32.mrb[0].mxu0
    %828 = vmatprep.mubr.f32.mxu0 0.0
    %829 = vmatmul.mubr.f32.gmra.mrb[0].mxu0 %v693
    %v830 = vpop.f32.mrb[0].mxu0
    %v831 = vadd.f32 %v742, %v830
    %v832 = vpop.f32.mrb[0].mxu0
    %833 = vmatprep.mubr.f32.mxu0 0.0
    %834 = vmatmul.mubr.f32.gmra.mrb[0].mxu0 %v694
    %v835 = vpop.f32.mrb[0].mxu0
    %v836 = vadd.f32 %v742, %v835
    %v837 = vpop.f32.mrb[0].mxu0
    %838 = vmatprep.mubr.f32.mxu0 0.0
    %839 = vmatmul.mubr.f32.gmra.mrb[0].mxu0 %v695
    %v840 = vpop.f32.mrb[0].mxu0
    %v841 = vadd.f32 %v742, %v840
    %v842 = vpop.f32.mrb[0].mxu0
    %843 = vmatprep.mubr.f32.mxu0 0.0
    %844 = vmatmul.mubr.f32.gmra.mrb[0].mxu0 %v696
    %v845 = vpop.f32.mrb[0].mxu0
    %v846 = vadd.f32 %v742, %v845
    %v847 = vpop.f32.mrb[0].mxu0
    %848 = vmatprep.mubr.f32.mxu0 0.0
    %849 = vmatmul.mubr.f32.gmra.mrb[0].mxu0 %v697
    %v850 = vpop.f32.mrb[0].mxu0
    %v851 = vadd.f32 %v742, %v850
    %v852 = vpop.f32.mrb[0].mxu0
    %853 = vmatprep.mubr.f32.mxu0 0.0
    %854 = vmatmul.mubr.f32.gmra.mrb[0].mxu0 %v698
    %v855 = vpop.f32.mrb[0].mxu0
    %v856 = vadd.f32 %v742, %v855
    %v857 = vpop.f32.mrb[0].mxu0
    %858 = vmatprep.mubr.f32.mxu0 0.0
    %859 = vmatmul.mubr.f32.gmra.mrb[0].mxu0 %v699
    %v860 = vpop.f32.mrb[0].mxu0
    %v861 = vadd.f32 %v742, %v860
    %v862 = vpop.f32.mrb[0].mxu0
    %863 = vmatprep.mubr.f32.mxu0 0.0
    %864 = vmatmul.mubr.f32.gmra.mrb[0].mxu0 %v700
    %v865 = vpop.f32.mrb[0].mxu0
    %v866 = vadd.f32 %v742, %v865
    %v867 = vpop.f32.mrb[0].mxu0
    %868 = vmatprep.mubr.f32.mxu0 0.0
    %869 = vmatmul.mubr.f32.gmra.mrb[0].mxu0 %v701
    %v870 = vpop.f32.mrb[0].mxu0
    %v871 = vadd.f32 %v742, %v870
    %v872 = vpop.f32.mrb[0].mxu0
    %873 = vmatprep.mubr.f32.mxu0 0.0
    %874 = vmatmul.mubr.f32.gmra.mrb[0].mxu0 %v702
    %v875 = vpop.f32.mrb[0].mxu0
    %v876 = vadd.f32 %v742, %v875
    %v877 = vpop.f32.mrb[0].mxu0
    %878 = vmatprep.mubr.f32.mxu0 0.0
    %879 = vmatmul.mubr.f32.gmra.mrb[0].mxu0 %v703
    %v880 = vpop.f32.mrb[0].mxu0
    %v881 = vadd.f32 %v742, %v880
    %v882 = vpop.f32.mrb[0].mxu0
    %883 = vmatprep.mubr.f32.mxu0 0.0
    %884 = vmatmul.mubr.f32.gmra.mrb[0].mxu0 %v704
    %v885 = vpop.f32.mrb[0].mxu0
    %v886 = vadd.f32 %v742, %v885
    %v887 = vpop.f32.mrb[0].mxu0
    %888 = vmatprep.mubr.f32.mxu0 0.0
    %889 = vmatmul.mubr.f32.gmra.mrb[0].mxu0 %v705
    %v890 = vpop.f32.mrb[0].mxu0
    %v891 = vadd.f32 %v742, %v890
    %v892 = vpop.f32.mrb[0].mxu0
    %893 = vmatprep.mubr.f32.mxu0 0.0
    %894 = vmatmul.mubr.f32.gmra.mrb[0].mxu0 %v706
    %v895 = vpop.f32.mrb[0].mxu0
    %v896 = vadd.f32 %v742, %v895
    %v897 = vpop.f32.mrb[0].mxu0
    %898 = vmatprep.mubr.f32.mxu0 0.0
    %899 = vmatmul.mubr.f32.gmra.mrb[0].mxu0 %v707
    %v900 = vpop.f32.mrb[0].mxu0
    %v901 = vadd.f32 %v742, %v900
    %v902 = vpop.f32.mrb[0].mxu0
    %903 = vmatprep.mubr.f32.mxu0 0.0
    %904 = vmatmul.mubr.f32.gmra.mrb[0].mxu0 %v708
    %v905 = vpop.f32.mrb[0].mxu0
    %v906 = vadd.f32 %v742, %v905
    %v907 = vpop.f32.mrb[0].mxu0
    %908 = vmatprep.mubr.f32.mxu0 0.0
    %909 = vmatmul.mubr.f32.gmra.mrb[0].mxu0 %v709
    %v910 = vpop.f32.mrb[0].mxu0
    %v911 = vadd.f32 %v742, %v910
    %v912 = vpop.f32.mrb[0].mxu0
    %913 = vmatprep.mubr.f32.mxu0 0.0
    %914 = vmatmul.mubr.f32.gmra.mrb[0].mxu0 %v710
    %v915 = vpop.f32.mrb[0].mxu0
    %v916 = vadd.f32 %v742, %v915
    %v917 = vpop.f32.mrb[0].mxu0
    %918 = vmatprep.mubr.f32.mxu0 0.0
    %919 = vmatmul.mubr.f32.gmra.mrb[0].mxu0 %v711
    %v920 = vpop.f32.mrb[0].mxu0
    %v921 = vadd.f32 %v742, %v920
    %v922 = vpop.f32.mrb[0].mxu0
    %923 = vmatprep.mubr.f32.mxu0 0.0
    %924 = vmatmul.mubr.f32.gmra.mrb[0].mxu0 %v712
    %v925 = vpop.f32.mrb[0].mxu0
    %v926 = vadd.f32 %v742, %v925
    %v927 = vpop.f32.mrb[0].mxu0
    %928 = vmatprep.mubr.f32.mxu0 0.0
    %929 = vmatmul.mubr.f32.gmra.mrb[0].mxu0 %v713
    %v930 = vpop.f32.mrb[0].mxu0
    %v931 = vadd.f32 %v742, %v930
    %v932 = vpop.f32.mrb[0].mxu0
    %933 = vmatprep.mubr.f32.mxu0 0.0
    %934 = vmatmul.mubr.f32.gmra.mrb[0].mxu0 %v714
    %v935 = vpop.f32.mrb[0].mxu0
    %v936 = vadd.f32 %v742, %v935
    %v937 = vpop.f32.mrb[0].mxu0
    %938 = vmatprep.mubr.f32.mxu0 0.0
    %939 = vmatmul.mubr.f32.gmra.mrb[0].mxu0 %v715
    %v940 = vpop.f32.mrb[0].mxu0
    %v941 = vadd.f32 %v742, %v940
    %v942 = vpop.f32.mrb[0].mxu0
    %943 = vmatprep.mubr.f32.mxu0 0.0
    %944 = vmatmul.mubr.f32.gmra.mrb[0].mxu0 %v716
    %v945 = vpop.f32.mrb[0].mxu0
    %v946 = vadd.f32 %v742, %v945
    %v947 = vpop.f32.mrb[0].mxu0
    %948 = vmatprep.mubr.f32.mxu0 0.0
    %949 = vmatmul.mubr.f32.gmra.mrb[0].mxu0 %v717
    %v950 = vpop.f32.mrb[0].mxu0
    %v951 = vadd.f32 %v742, %v950
    %v952 = vpop.f32.mrb[0].mxu0
    %953 = vmatprep.mubr.f32.mxu0 0.0
    %954 = vmatmul.mubr.f32.gmra.mrb[0].mxu0 %v718
    %v955 = vpop.f32.mrb[0].mxu0
    %v956 = vadd.f32 %v742, %v955
    %v957 = vpop.f32.mrb[0].mxu0
    %958 = vmatprep.mubr.f32.mxu0 0.0
    %959 = vmatmul.mubr.f32.gmra.mrb[0].mxu0 %v719
    %v960 = vpop.f32.mrb[0].mxu0
    %v961 = vadd.f32 %v742, %v960
    %v962 = vpop.f32.mrb[0].mxu0
    %963 = vmatprep.mubr.f32.mxu0 0.0
    %964 = vmatmul.mubr.f32.gmra.mrb[0].mxu0 %v720
    %v965 = vpop.f32.mrb[0].mxu0
    %v966 = vadd.f32 %v742, %v965
    %v967 = vpop.f32.mrb[0].mxu0
    %968 = vdwg.mxu0
    %v969 = vmax.f32 %v811, 0.0
    %v970 = vmax.f32 %v816, 0.0
    %v971 = vmax.f32 %v821, 0.0
    %v972 = vmax.f32 %v826, 0.0
    %v973 = vmax.f32 %v831, 0.0
    %v974 = vmax.f32 %v836, 0.0
    %v975 = vmax.f32 %v841, 0.0
    %v976 = vmax.f32 %v846, 0.0
    %v977 = vmax.f32 %v851, 0.0
    %v978 = vmax.f32 %v856, 0.0
    %v979 = vmax.f32 %v861, 0.0
    %v980 = vmax.f32 %v866, 0.0
    %v981 = vmax.f32 %v871, 0.0
    %v982 = vmax.f32 %v876, 0.0
    %v983 = vmax.f32 %v881, 0.0
    %v984 = vmax.f32 %v886, 0.0
    %v985 = vmax.f32 %v891, 0.0
    %v986 = vmax.f32 %v896, 0.0
    %v987 = vmax.f32 %v901, 0.0
    %v988 = vmax.f32 %v906, 0.0
    %v989 = vmax.f32 %v911, 0.0
    %v990 = vmax.f32 %v916, 0.0
    %v991 = vmax.f32 %v921, 0.0
    %v992 = vmax.f32 %v926, 0.0
    %v993 = vmax.f32 %v931, 0.0
    %v994 = vmax.f32 %v936, 0.0
    %v995 = vmax.f32 %v941, 0.0
    %v996 = vmax.f32 %v946, 0.0
    %v997 = vmax.f32 %v951, 0.0
    %v998 = vmax.f32 %v956, 0.0
    %v999 = vmax.f32 %v961, 0.0
    %v1000 = vmax.f32 %v966, 0.0
    %v1001 = vld [vmem:[%s7] sm:$0xff]
    %v1002 = vld [vmem:[%s7 + $0x8] sm:$0xff]
    %v1003 = vld [vmem:[%s7 + $0x10] sm:$0xff]
    %v1004 = vld [vmem:[%s7 + $0x18] sm:$0xff]
    %v1005 = vld [vmem:[%s7 + $0x20] sm:$0xff]
    %v1006 = vld [vmem:[%s7 + $0x28] sm:$0xff]
    %v1007 = vld [vmem:[%s7 + $0x30] sm:$0xff]
    %v1008 = vld [vmem:[%s7 + $0x38] sm:$0xff]
    %v1009 = vld [vmem:[%s7 + $0x40] sm:$0xff]
    %v1010 = vld [vmem:[%s7 + $0x48] sm:$0xff]
    %v1011 = vld [vmem:[%s7 + $0x50] sm:$0xff]
    %v1012 = vld [vmem:[%s7 + $0x58] sm:$0xff]
    %v1013 = vld [vmem:[%s7 + $0x60] sm:$0xff]
    %v1014 = vld [vmem:[%s7 + $0x68] sm:$0xff]
    %v1015 = vld [vmem:[%s7 + $0x70] sm:$0xff]
    %v1016 = vld [vmem:[%s7 + $0x78] sm:$0xff]
    %v1017 = vld [vmem:[%s8] sm:$0x1]
    %v1019 = vlaneseq
    %v1020 = vshrl.u32 %v1019, 7
    %v1021 = vsub.s32 0, %v1020
    %v1022 = vrot.slane %v1017, %v1021
    %1024 = vmatprep.subr.mxu0 0.0
    %1025 = vmatpush1.msra.mxu0 %v1001
    %1026 = vmatprep.subr.mxu0 0.0
    %1027 = vmatpush1.msra.mxu0 %v1002
    %1028 = vmatprep.subr.mxu0 0.0
    %1029 = vmatpush1.msra.mxu0 %v1003
    %1030 = vmatprep.subr.mxu0 0.0
    %1031 = vmatpush1.msra.mxu0 %v1004
    %1032 = vmatprep.subr.mxu0 0.0
    %1033 = vmatpush1.msra.mxu0 %v1005
    %1034 = vmatprep.subr.mxu0 0.0
    %1035 = vmatpush1.msra.mxu0 %v1006
    %1036 = vmatprep.subr.mxu0 0.0
    %1037 = vmatpush1.msra.mxu0 %v1007
    %1038 = vmatprep.subr.mxu0 0.0
    %1039 = vmatpush1.msra.mxu0 %v1008
    %1040 = vmatprep.subr.mxu0 0.0
    %1041 = vmatpush1.msra.mxu0 %v1009
    %1042 = vmatprep.subr.mxu0 0.0
    %1043 = vmatpush1.msra.mxu0 %v1010
    %1044 = vmatprep.subr.mxu0 0.0
    %1045 = vmatpush1.msra.mxu0 %v1011
    %1046 = vmatprep.subr.mxu0 0.0
    %1047 = vmatpush1.msra.mxu0 %v1012
    %1048 = vmatprep.subr.mxu0 0.0
    %1049 = vmatpush1.msra.mxu0 %v1013
    %1050 = vmatprep.subr.mxu0 0.0
    %1051 = vmatpush1.msra.mxu0 %v1014
    %1052 = vmatprep.subr.mxu0 0.0
    %1053 = vmatpush1.msra.mxu0 %v1015
    %1054 = vmatprep.subr.mxu0 0.0
    %1055 = vmatpush1.msra.mxu0 %v1016
    %1056 = vmatprep.subr.mxu0 0.0
    %1057 = vmatpush1.msra.mxu0 0.0
    %1058 = vmatprep.subr.mxu0 0.0
    %1059 = vmatpush1.msra.mxu0 0.0
    %1060 = vmatprep.subr.mxu0 0.0
    %1061 = vmatpush1.msra.mxu0 0.0
    %1062 = vmatprep.subr.mxu0 0.0
    %1063 = vmatpush1.msra.mxu0 0.0
    %1064 = vmatprep.subr.mxu0 0.0
    %1065 = vmatpush1.msra.mxu0 0.0
    %1066 = vmatprep.subr.mxu0 0.0
    %1067 = vmatpush1.msra.mxu0 0.0
    %1068 = vmatprep.subr.mxu0 0.0
    %1069 = vmatpush1.msra.mxu0 0.0
    %1070 = vmatprep.subr.mxu0 0.0
    %1071 = vmatpush1.msra.mxu0 0.0
    %1072 = vmatprep.subr.mxu0 0.0
    %1073 = vmatpush1.msra.mxu0 0.0
    %1074 = vmatprep.subr.mxu0 0.0
    %1075 = vmatpush1.msra.mxu0 0.0
    %1076 = vmatprep.subr.mxu0 0.0
    %1077 = vmatpush1.msra.mxu0 0.0
    %1078 = vmatprep.subr.mxu0 0.0
    %1079 = vmatpush1.msra.mxu0 0.0
    %1080 = vmatprep.subr.mxu0 0.0
    %1081 = vmatpush1.msra.mxu0 0.0
    %1082 = vmatprep.subr.mxu0 0.0
    %1083 = vmatpush1.msra.mxu0 0.0
    %1084 = vmatprep.subr.mxu0 0.0
    %1085 = vmatpush1.msra.mxu0 0.0
    %1086 = vmatprep.subr.mxu0 0.0
    %1087 = vmatpush1.msra.mxu0 0.0
    %1088 = vmatprep.mubr.f32.mxu0 0.0
    %1089 = vmatmul.mubr.f32.gmra.mrb[0].mxu0 %v969
    %v1090 = vpop.f32.mrb[0].mxu0
    %v1091 = vadd.f32 %v1022, %v1090
    %v1092 = vpop.f32.mrb[0].mxu0
    %1093 = vmatprep.mubr.f32.mxu0 0.0
    %1094 = vmatmul.mubr.f32.gmra.mrb[0].mxu0 %v970
    %v1095 = vpop.f32.mrb[0].mxu0
    %v1096 = vadd.f32 %v1022, %v1095
    %v1097 = vpop.f32.mrb[0].mxu0
    %1098 = vmatprep.mubr.f32.mxu0 0.0
    %1099 = vmatmul.mubr.f32.gmra.mrb[0].mxu0 %v971
    %v1100 = vpop.f32.mrb[0].mxu0
    %v1101 = vadd.f32 %v1022, %v1100
    %v1102 = vpop.f32.mrb[0].mxu0
    %1103 = vmatprep.mubr.f32.mxu0 0.0
    %1104 = vmatmul.mubr.f32.gmra.mrb[0].mxu0 %v972
    %v1105 = vpop.f32.mrb[0].mxu0
    %v1106 = vadd.f32 %v1022, %v1105
    %v1107 = vpop.f32.mrb[0].mxu0
    %1108 = vmatprep.mubr.f32.mxu0 0.0
    %1109 = vmatmul.mubr.f32.gmra.mrb[0].mxu0 %v973
    %v1110 = vpop.f32.mrb[0].mxu0
    %v1111 = vadd.f32 %v1022, %v1110
    %v1112 = vpop.f32.mrb[0].mxu0
    %1113 = vmatprep.mubr.f32.mxu0 0.0
    %1114 = vmatmul.mubr.f32.gmra.mrb[0].mxu0 %v974
    %v1115 = vpop.f32.mrb[0].mxu0
    %v1116 = vadd.f32 %v1022, %v1115
    %v1117 = vpop.f32.mrb[0].mxu0
    %1118 = vmatprep.mubr.f32.mxu0 0.0
    %1119 = vmatmul.mubr.f32.gmra.mrb[0].mxu0 %v975
    %v1120 = vpop.f32.mrb[0].mxu0
    %v1121 = vadd.f32 %v1022, %v1120
    %v1122 = vpop.f32.mrb[0].mxu0
    %1123 = vmatprep.mubr.f32.mxu0 0.0
    %1124 = vmatmul.mubr.f32.gmra.mrb[0].mxu0 %v976
    %v1125 = vpop.f32.mrb[0].mxu0
    %v1126 = vadd.f32 %v1022, %v1125
    %v1127 = vpop.f32.mrb[0].mxu0
    %1128 = vmatprep.mubr.f32.mxu0 0.0
    %1129 = vmatmul.mubr.f32.gmra.mrb[0].mxu0 %v977
    %v1130 = vpop.f32.mrb[0].mxu0
    %v1131 = vadd.f32 %v1022, %v1130
    %v1132 = vpop.f32.mrb[0].mxu0
    %1133 = vmatprep.mubr.f32.mxu0 0.0
    %1134 = vmatmul.mubr.f32.gmra.mrb[0].mxu0 %v978
    %v1135 = vpop.f32.mrb[0].mxu0
    %v1136 = vadd.f32 %v1022, %v1135
    %v1137 = vpop.f32.mrb[0].mxu0
    %1138 = vmatprep.mubr.f32.mxu0 0.0
    %1139 = vmatmul.mubr.f32.gmra.mrb[0].mxu0 %v979
    %v1140 = vpop.f32.mrb[0].mxu0
    %v1141 = vadd.f32 %v1022, %v1140
    %v1142 = vpop.f32.mrb[0].mxu0
    %1143 = vmatprep.mubr.f32.mxu0 0.0
    %1144 = vmatmul.mubr.f32.gmra.mrb[0].mxu0 %v980
    %v1145 = vpop.f32.mrb[0].mxu0
    %v1146 = vadd.f32 %v1022, %v1145
    %v1147 = vpop.f32.mrb[0].mxu0
    %1148 = vmatprep.mubr.f32.mxu0 0.0
    %1149 = vmatmul.mubr.f32.gmra.mrb[0].mxu0 %v981
    %v1150 = vpop.f32.mrb[0].mxu0
    %v1151 = vadd.f32 %v1022, %v1150
    %v1152 = vpop.f32.mrb[0].mxu0
    %1153 = vmatprep.mubr.f32.mxu0 0.0
    %1154 = vmatmul.mubr.f32.gmra.mrb[0].mxu0 %v982
    %v1155 = vpop.f32.mrb[0].mxu0
    %v1156 = vadd.f32 %v1022, %v1155
    %v1157 = vpop.f32.mrb[0].mxu0
    %1158 = vmatprep.mubr.f32.mxu0 0.0
    %1159 = vmatmul.mubr.f32.gmra.mrb[0].mxu0 %v983
    %v1160 = vpop.f32.mrb[0].mxu0
    %v1161 = vadd.f32 %v1022, %v1160
    %v1162 = vpop.f32.mrb[0].mxu0
    %1163 = vmatprep.mubr.f32.mxu0 0.0
    %1164 = vmatmul.mubr.f32.gmra.mrb[0].mxu0 %v984
    %v1165 = vpop.f32.mrb[0].mxu0
    %v1166 = vadd.f32 %v1022, %v1165
    %v1167 = vpop.f32.mrb[0].mxu0
    %1168 = vmatprep.mubr.f32.mxu0 0.0
    %1169 = vmatmul.mubr.f32.gmra.mrb[0].mxu0 %v985
    %v1170 = vpop.f32.mrb[0].mxu0
    %v1171 = vadd.f32 %v1022, %v1170
    %v1172 = vpop.f32.mrb[0].mxu0
    %1173 = vmatprep.mubr.f32.mxu0 0.0
    %1174 = vmatmul.mubr.f32.gmra.mrb[0].mxu0 %v986
    %v1175 = vpop.f32.mrb[0].mxu0
    %v1176 = vadd.f32 %v1022, %v1175
    %v1177 = vpop.f32.mrb[0].mxu0
    %1178 = vmatprep.mubr.f32.mxu0 0.0
    %1179 = vmatmul.mubr.f32.gmra.mrb[0].mxu0 %v987
    %v1180 = vpop.f32.mrb[0].mxu0
    %v1181 = vadd.f32 %v1022, %v1180
    %v1182 = vpop.f32.mrb[0].mxu0
    %1183 = vmatprep.mubr.f32.mxu0 0.0
    %1184 = vmatmul.mubr.f32.gmra.mrb[0].mxu0 %v988
    %v1185 = vpop.f32.mrb[0].mxu0
    %v1186 = vadd.f32 %v1022, %v1185
    %v1187 = vpop.f32.mrb[0].mxu0
    %1188 = vmatprep.mubr.f32.mxu0 0.0
    %1189 = vmatmul.mubr.f32.gmra.mrb[0].mxu0 %v989
    %v1190 = vpop.f32.mrb[0].mxu0
    %v1191 = vadd.f32 %v1022, %v1190
    %v1192 = vpop.f32.mrb[0].mxu0
    %1193 = vmatprep.mubr.f32.mxu0 0.0
    %1194 = vmatmul.mubr.f32.gmra.mrb[0].mxu0 %v990
    %v1195 = vpop.f32.mrb[0].mxu0
    %v1196 = vadd.f32 %v1022, %v1195
    %v1197 = vpop.f32.mrb[0].mxu0
    %1198 = vmatprep.mubr.f32.mxu0 0.0
    %1199 = vmatmul.mubr.f32.gmra.mrb[0].mxu0 %v991
    %v1200 = vpop.f32.mrb[0].mxu0
    %v1201 = vadd.f32 %v1022, %v1200
    %v1202 = vpop.f32.mrb[0].mxu0
    %1203 = vmatprep.mubr.f32.mxu0 0.0
    %1204 = vmatmul.mubr.f32.gmra.mrb[0].mxu0 %v992
    %v1205 = vpop.f32.mrb[0].mxu0
    %v1206 = vadd.f32 %v1022, %v1205
    %v1207 = vpop.f32.mrb[0].mxu0
    %1208 = vmatprep.mubr.f32.mxu0 0.0
    %1209 = vmatmul.mubr.f32.gmra.mrb[0].mxu0 %v993
    %v1210 = vpop.f32.mrb[0].mxu0
    %v1211 = vadd.f32 %v1022, %v1210
    %v1212 = vpop.f32.mrb[0].mxu0
    %1213 = vmatprep.mubr.f32.mxu0 0.0
    %1214 = vmatmul.mubr.f32.gmra.mrb[0].mxu0 %v994
    %v1215 = vpop.f32.mrb[0].mxu0
    %v1216 = vadd.f32 %v1022, %v1215
    %v1217 = vpop.f32.mrb[0].mxu0
    %1218 = vmatprep.mubr.f32.mxu0 0.0
    %1219 = vmatmul.mubr.f32.gmra.mrb[0].mxu0 %v995
    %v1220 = vpop.f32.mrb[0].mxu0
    %v1221 = vadd.f32 %v1022, %v1220
    %v1222 = vpop.f32.mrb[0].mxu0
    %1223 = vmatprep.mubr.f32.mxu0 0.0
    %1224 = vmatmul.mubr.f32.gmra.mrb[0].mxu0 %v996
    %v1225 = vpop.f32.mrb[0].mxu0
    %v1226 = vadd.f32 %v1022, %v1225
    %v1227 = vpop.f32.mrb[0].mxu0
    %1228 = vmatprep.mubr.f32.mxu0 0.0
    %1229 = vmatmul.mubr.f32.gmra.mrb[0].mxu0 %v997
    %v1230 = vpop.f32.mrb[0].mxu0
    %v1231 = vadd.f32 %v1022, %v1230
    %v1232 = vpop.f32.mrb[0].mxu0
    %1233 = vmatprep.mubr.f32.mxu0 0.0
    %1234 = vmatmul.mubr.f32.gmra.mrb[0].mxu0 %v998
    %v1235 = vpop.f32.mrb[0].mxu0
    %v1236 = vadd.f32 %v1022, %v1235
    %v1237 = vpop.f32.mrb[0].mxu0
    %1238 = vmatprep.mubr.f32.mxu0 0.0
    %1239 = vmatmul.mubr.f32.gmra.mrb[0].mxu0 %v999
    %v1240 = vpop.f32.mrb[0].mxu0
    %v1241 = vadd.f32 %v1022, %v1240
    %v1242 = vpop.f32.mrb[0].mxu0
    %1243 = vmatprep.mubr.f32.mxu0 0.0
    %1244 = vmatmul.mubr.f32.gmra.mrb[0].mxu0 %v1000
    %v1245 = vpop.f32.mrb[0].mxu0
    %v1246 = vadd.f32 %v1022, %v1245
    %v1247 = vpop.f32.mrb[0].mxu0
    %1248 = vdwg.mxu0
    %vm1249 = vcmask 64512
    %1250 = vst.msk [vmem:[%s9] sm:$0xff] %vm1249, %v1091
    %1251 = vst.msk [vmem:[%s9 + $0x8] sm:$0xff] %vm1249, %v1096
    %1252 = vst.msk [vmem:[%s9 + $0x10] sm:$0xff] %vm1249, %v1101
    %1253 = vst.msk [vmem:[%s9 + $0x18] sm:$0xff] %vm1249, %v1106
    %1254 = vst.msk [vmem:[%s9 + $0x20] sm:$0xff] %vm1249, %v1111
    %1255 = vst.msk [vmem:[%s9 + $0x28] sm:$0xff] %vm1249, %v1116
    %1256 = vst.msk [vmem:[%s9 + $0x30] sm:$0xff] %vm1249, %v1121
    %1257 = vst.msk [vmem:[%s9 + $0x38] sm:$0xff] %vm1249, %v1126
    %1258 = vst.msk [vmem:[%s9 + $0x40] sm:$0xff] %vm1249, %v1131
    %1259 = vst.msk [vmem:[%s9 + $0x48] sm:$0xff] %vm1249, %v1136
    %1260 = vst.msk [vmem:[%s9 + $0x50] sm:$0xff] %vm1249, %v1141
    %1261 = vst.msk [vmem:[%s9 + $0x58] sm:$0xff] %vm1249, %v1146
    %1262 = vst.msk [vmem:[%s9 + $0x60] sm:$0xff] %vm1249, %v1151
    %1263 = vst.msk [vmem:[%s9 + $0x68] sm:$0xff] %vm1249, %v1156
    %1264 = vst.msk [vmem:[%s9 + $0x70] sm:$0xff] %vm1249, %v1161
    %1265 = vst.msk [vmem:[%s9 + $0x78] sm:$0xff] %vm1249, %v1166
    %1266 = vst.msk [vmem:[%s9 + $0x80] sm:$0xff] %vm1249, %v1171
    %1267 = vst.msk [vmem:[%s9 + $0x88] sm:$0xff] %vm1249, %v1176
    %1268 = vst.msk [vmem:[%s9 + $0x90] sm:$0xff] %vm1249, %v1181
    %1269 = vst.msk [vmem:[%s9 + $0x98] sm:$0xff] %vm1249, %v1186
    %1270 = vst.msk [vmem:[%s9 + $0xa0] sm:$0xff] %vm1249, %v1191
    %1271 = vst.msk [vmem:[%s9 + $0xa8] sm:$0xff] %vm1249, %v1196
    %1272 = vst.msk [vmem:[%s9 + $0xb0] sm:$0xff] %vm1249, %v1201
    %1273 = vst.msk [vmem:[%s9 + $0xb8] sm:$0xff] %vm1249, %v1206
    %1274 = vst.msk [vmem:[%s9 + $0xc0] sm:$0xff] %vm1249, %v1211
    %1275 = vst.msk [vmem:[%s9 + $0xc8] sm:$0xff] %vm1249, %v1216
    %1276 = vst.msk [vmem:[%s9 + $0xd0] sm:$0xff] %vm1249, %v1221
    %1277 = vst.msk [vmem:[%s9 + $0xd8] sm:$0xff] %vm1249, %v1226
    %1278 = vst.msk [vmem:[%s9 + $0xe0] sm:$0xff] %vm1249, %v1231
    %1279 = vst.msk [vmem:[%s9 + $0xe8] sm:$0xff] %vm1249, %v1236
    %1280 = vst.msk [vmem:[%s9 + $0xf0] sm:$0xff] %vm1249, %v1241
    %1281 = vst.msk [vmem:[%s9 + $0xf8] sm:$0xff] %vm1249, %v1246
    // Predicated region
    $region42: #{mlp_forward.1} parent=1 // pred_check
      _
    $region43: #{mlp_forward.1} parent=1 // pred_check_branch
      %1283 = sbr.rel (0) target = $region45
    $region44: #{mlp_forward.1} parent=1 // pred_region
      _
    $region45: #{mlp_forward.1} parent=1 // pred_fallthru
      _
    // Predicated region
    $region46: #{mlp_forward.1} parent=1 // pred_check
      _
    $region47: #{mlp_forward.1} parent=1 // pred_check_branch
      %1285 = sbr.rel (0) target = $region49
    $region48: #{mlp_forward.1} parent=1 // pred_region
      _
    $region49: #{mlp_forward.1} parent=1 // pred_fallthru
      _
    %1286 = vsyncpa [#allocation3], 1

</llo_original>
